<compile_context>
chip_gen: v7x
topology: tpu7x:2x2x1
jax: 0.10.0
libtpu: 0.0.40
codegen_flags: <defaults>
</compile_context>

<pallas_src>
import functools

import jax
import jax.numpy as jnp
from jax import lax
from jax.experimental import pallas as pl
from jax.experimental.pallas import tpu as pltpu

LAYER_DIMS = [6, 64, 32, 16, 8, 4, 2, 1]
NEG_SLOPE = 0.01


def _round8(n):
    return max(8, ((n + 7) // 8) * 8)


def uber_reg_kernel(*refs, chunk):
    # refs = (x_ref, w1, b1, w2, b2, ..., w7, b7, o_ref)
    # x_ref : (8, tb)   feature-major f32 input tile (6 real feature rows)
    # w_i   : (out_pad_i, in_pad_i) bf16, zero-padded to true-size-mod-8
    # b_i   : (out_pad_i, 1) f32
    # o_ref : (1, tb) f32
    x_ref, o_ref = refs[0], refs[-1]
    wb = refs[1:-1]
    n_layers = len(wb) // 2

    # Hoist the (tiny) weight/bias loads out of the chunk loop.
    ws = [wb[2 * i][...] for i in range(n_layers)]      # bf16
    bs = [wb[2 * i + 1][...] for i in range(n_layers)]  # f32

    nc = x_ref.shape[1] // chunk   # static

    def body(c, carry):
        col = pl.multiple_of(c * chunk, chunk)
        # (8, chunk) f32 -> bf16 (cheap: 8 rows), stays in vregs across layers.
        h = x_ref[:, pl.ds(col, chunk)].astype(jnp.bfloat16)
        for li in range(n_layers):
            z = jnp.dot(ws[li], h, preferred_element_type=jnp.float32) + bs[li]
            z = jnp.maximum(z, NEG_SLOPE * z)            # LeakyReLU in f32
            h = z.astype(jnp.bfloat16) if li + 1 < n_layers else z
        # Lane-dense store of the single real output row for this chunk.
        o_ref[:, pl.ds(col, chunk)] = h[0:1, :].astype(o_ref.dtype)
        return carry

    lax.fori_loop(0, nc, body, 0, unroll=True)


def pack_params(params):
    """params: list of (W (out,in) f32, b (out,) f32) in nn.Linear convention.

    Returns per-layer (bf16 weight, f32 bias) zero-padded to mod-8 shapes.
    """
    ws, bs = [], []
    for w, b in params:
        out_d, in_d = w.shape
        out_p, in_p = _round8(out_d), _round8(in_d)
        wp = jnp.zeros((out_p, in_p), jnp.float32).at[:out_d, :in_d].set(w)
        bp = jnp.zeros((out_p, 1), jnp.float32).at[:out_d, 0].set(b)
        ws.append(wp.astype(jnp.bfloat16))
        bs.append(bp)
    return ws, bs


def uber_reg_forward(x, params, tb=4096):
    """x: (B, 6) float32; params: list of (W (out,in), b (out,)). Returns (B, 1)."""
    B = x.shape[0]

    # Tile-size selection: keep lane dim a multiple of 128, don't over-pad tiny
    # batches, and prefer >=2 grid steps so v7x's two TensorCores both get work.
    b128 = pl.cdiv(B, 128) * 128
    tb = min(tb, b128)
    if b128 >= 256:
        tb = min(tb, (b128 // 2 // 128) * 128)
    tb = max(tb, 128)
    b_pad = pl.cdiv(B, tb) * tb

    # In-kernel column chunk (register-resident across all 7 layers).
    chunk = 256 if tb % 256 == 0 else 128

    # Feature-major, zero-padded f32 input: (8, B_pad). Kept f32 in HBM; cast
    # to bf16 inside the kernel (sidesteps the bf16 sublane quantum for 8 rows).
    x_fm = jnp.zeros((8, b_pad), jnp.float32)
    x_fm = x_fm.at[: x.shape[1], :B].set(x.T.astype(jnp.float32))
    # TODO(synk): the pad+transpose could be fused into the kernel via an
    # in-kernel dot_general on the natural (B, 6) layout; kept host-side here.

    ws, bs = pack_params(params)

    inputs = [x_fm]
    in_specs = [pl.BlockSpec((8, tb), lambda i: (0, i))]
    for w, b in zip(ws, bs):
        inputs.append(w)
        in_specs.append(pl.BlockSpec(w.shape, lambda i: (0, 0)))  # VMEM-resident
        inputs.append(b)
        in_specs.append(pl.BlockSpec(b.shape, lambda i: (0, 0)))  # VMEM-resident

    out = pl.pallas_call(
        functools.partial(uber_reg_kernel, chunk=chunk),
        out_shape=jax.ShapeDtypeStruct((1, b_pad), jnp.float32),
        grid=(b_pad // tb,),
        in_specs=in_specs,
        out_specs=pl.BlockSpec((1, tb), lambda i: (0, i)),
        compiler_params=pltpu.CompilerParams(
            dimension_semantics=("parallel",)),
    )(*inputs)

    return out[0, :B].reshape(B, 1)


def init_params(key):
    """nn.Linear-style init: W (out,in), b (out,), U(-1/sqrt(fan_in), 1/sqrt(fan_in))."""
    params = []
    for i in range(len(LAYER_DIMS) - 1):
        fan_in, fan_out = LAYER_DIMS[i], LAYER_DIMS[i + 1]
        key, kw, kb = jax.random.split(key, 3)
        bound = 1.0 / jnp.sqrt(float(fan_in))
        w = jax.random.uniform(kw, (fan_out, fan_in), jnp.float32, -bound, bound)
        b = jax.random.uniform(kb, (fan_out,), jnp.float32, -bound, bound)
        params.append((w, b))
    return params


def reference_forward(x, params):
    """Pure-f32 reference (matches the PyTorch module semantics)."""
    h = x
    for w, b in params:
        h = h @ w.T + b
        h = jnp.where(h >= 0, h, NEG_SLOPE * h)
    return h


def reference_forward_bf16(x, params):
    """Reference with the kernel's quantization points (bf16 dot operands, f32 accum)."""
    h = x.astype(jnp.float32)
    for w, b in params:
        z = jnp.dot(h.astype(jnp.bfloat16), w.T.astype(jnp.bfloat16),
                    preferred_element_type=jnp.float32) + b
        h = jnp.where(z >= 0, z, NEG_SLOPE * z)
    return h


# TODO(synk): save_model/load_model/predict_sample are host-side I/O helpers with
# no kernel equivalent; only the forward pass is implemented.

if __name__ == "__main__":
    key = jax.random.PRNGKey(0)
    key, kx = jax.random.split(key)
    params = init_params(key)

    def check(x):
        out = jax.block_until_ready(uber_reg_forward(x, params))
        assert out.shape == (x.shape[0], 1)
        ref_bf = reference_forward_bf16(x, params)
        ref_32 = reference_forward(x, params)
        # Tight vs a reference with identical bf16 quantization points.
        assert jnp.allclose(out, ref_bf, atol=1e-3, rtol=1e-3)
        # Loose vs the pure-f32 (PyTorch-equivalent) reference.
        assert jnp.allclose(out, ref_32, atol=5e-2, rtol=5e-2)
        return out

    # Small batch (single tile, single chunk).
    B = 8
    x = jax.random.normal(kx, (B, 6), jnp.float32)
    check(x)

    # Non-multiple batch with multiple grid tiles (padding + pipeline).
    key, kx2 = jax.random.split(key)
    x2 = jax.random.normal(kx2, (300, 6), jnp.float32)
    check(x2)

    # Larger batch: exercises >=2 grid steps and multi-chunk inner loop.
    key, kx3 = jax.random.split(key)
    x3 = jax.random.normal(kx3, (1029, 6), jnp.float32)
    check(x3)

    print("KERNEL_OK")
</pallas_src>

<mosaic_0001>
module attributes {stable_mosaic.version = 11 : i64} {
  func.func @uber_reg_kernel(%arg0: i32, %arg1: memref<8x128xf32, #tpu.memory_space<vmem>>, %arg2: memref<64x8xbf16, #tpu.memory_space<vmem>>, %arg3: memref<64x1xf32, #tpu.memory_space<vmem>>, %arg4: memref<32x64xbf16, #tpu.memory_space<vmem>>, %arg5: memref<32x1xf32, #tpu.memory_space<vmem>>, %arg6: memref<16x32xbf16, #tpu.memory_space<vmem>>, %arg7: memref<16x1xf32, #tpu.memory_space<vmem>>, %arg8: memref<8x16xbf16, #tpu.memory_space<vmem>>, %arg9: memref<8x1xf32, #tpu.memory_space<vmem>>, %arg10: memref<8x8xbf16, #tpu.memory_space<vmem>>, %arg11: memref<8x1xf32, #tpu.memory_space<vmem>>, %arg12: memref<8x8xbf16, #tpu.memory_space<vmem>>, %arg13: memref<8x1xf32, #tpu.memory_space<vmem>>, %arg14: memref<8x8xbf16, #tpu.memory_space<vmem>>, %arg15: memref<8x1xf32, #tpu.memory_space<vmem>>, %arg16: memref<1x128xf32, #tpu.memory_space<vmem>>) attributes {dimension_semantics = [#tpu.dimension_semantics<parallel>], iteration_bounds = array<i64: 1>, scalar_prefetch = 0 : i64, scratch_operands = 0 : i64, tpu.core_type = #tpu.core_type<tc>, window_params = [{transform_indices = @transform_0, window_bounds = array<i64: 8, 128>}, {pipeline_mode = #tpu.pipeline_mode<synchronous>, transform_indices = @transform_1, window_bounds = array<i64: 64, 8>}, {pipeline_mode = #tpu.pipeline_mode<synchronous>, transform_indices = @transform_2, window_bounds = array<i64: 64, 1>}, {pipeline_mode = #tpu.pipeline_mode<synchronous>, transform_indices = @transform_3, window_bounds = array<i64: 32, 64>}, {pipeline_mode = #tpu.pipeline_mode<synchronous>, transform_indices = @transform_4, window_bounds = array<i64: 32, 1>}, {pipeline_mode = #tpu.pipeline_mode<synchronous>, transform_indices = @transform_5, window_bounds = array<i64: 16, 32>}, {pipeline_mode = #tpu.pipeline_mode<synchronous>, transform_indices = @transform_6, window_bounds = array<i64: 16, 1>}, {pipeline_mode = #tpu.pipeline_mode<synchronous>, transform_indices = @transform_7, window_bounds = array<i64: 8, 16>}, {pipeline_mode = #tpu.pipeline_mode<synchronous>, transform_indices = @transform_8, window_bounds = array<i64: 8, 1>}, {pipeline_mode = #tpu.pipeline_mode<synchronous>, transform_indices = @transform_9, window_bounds = array<i64: 8, 8>}, {pipeline_mode = #tpu.pipeline_mode<synchronous>, transform_indices = @transform_10, window_bounds = array<i64: 8, 1>}, {pipeline_mode = #tpu.pipeline_mode<synchronous>, transform_indices = @transform_11, window_bounds = array<i64: 8, 8>}, {pipeline_mode = #tpu.pipeline_mode<synchronous>, transform_indices = @transform_12, window_bounds = array<i64: 8, 1>}, {pipeline_mode = #tpu.pipeline_mode<synchronous>, transform_indices = @transform_13, window_bounds = array<i64: 8, 8>}, {pipeline_mode = #tpu.pipeline_mode<synchronous>, transform_indices = @transform_14, window_bounds = array<i64: 8, 1>}, {transform_indices = @transform_15, window_bounds = array<i64: 1, 128>}]} {
    %c0 = arith.constant 0 : index
    %c0_0 = arith.constant 0 : index
    %0 = vector.load %arg2[%c0, %c0_0] : memref<64x8xbf16, #tpu.memory_space<vmem>>, vector<64x8xbf16>
    %c0_1 = arith.constant 0 : index
    %c0_2 = arith.constant 0 : index
    %1 = vector.load %arg4[%c0_1, %c0_2] : memref<32x64xbf16, #tpu.memory_space<vmem>>, vector<32x64xbf16>
    %c0_3 = arith.constant 0 : index
    %c0_4 = arith.constant 0 : index
    %2 = vector.load %arg6[%c0_3, %c0_4] : memref<16x32xbf16, #tpu.memory_space<vmem>>, vector<16x32xbf16>
    %c0_5 = arith.constant 0 : index
    %c0_6 = arith.constant 0 : index
    %3 = vector.load %arg8[%c0_5, %c0_6] : memref<8x16xbf16, #tpu.memory_space<vmem>>, vector<8x16xbf16>
    %c0_7 = arith.constant 0 : index
    %c0_8 = arith.constant 0 : index
    %4 = vector.load %arg10[%c0_7, %c0_8] : memref<8x8xbf16, #tpu.memory_space<vmem>>, vector<8x8xbf16>
    %c0_9 = arith.constant 0 : index
    %c0_10 = arith.constant 0 : index
    %5 = vector.load %arg12[%c0_9, %c0_10] : memref<8x8xbf16, #tpu.memory_space<vmem>>, vector<8x8xbf16>
    %c0_11 = arith.constant 0 : index
    %c0_12 = arith.constant 0 : index
    %6 = vector.load %arg14[%c0_11, %c0_12] : memref<8x8xbf16, #tpu.memory_space<vmem>>, vector<8x8xbf16>
    %c0_13 = arith.constant 0 : index
    %c0_14 = arith.constant 0 : index
    %7 = vector.load %arg3[%c0_13, %c0_14] : memref<64x1xf32, #tpu.memory_space<vmem>>, vector<64x1xf32>
    %c0_15 = arith.constant 0 : index
    %c0_16 = arith.constant 0 : index
    %8 = vector.load %arg5[%c0_15, %c0_16] : memref<32x1xf32, #tpu.memory_space<vmem>>, vector<32x1xf32>
    %c0_17 = arith.constant 0 : index
    %c0_18 = arith.constant 0 : index
    %9 = vector.load %arg7[%c0_17, %c0_18] : memref<16x1xf32, #tpu.memory_space<vmem>>, vector<16x1xf32>
    %c0_19 = arith.constant 0 : index
    %c0_20 = arith.constant 0 : index
    %10 = vector.load %arg9[%c0_19, %c0_20] : memref<8x1xf32, #tpu.memory_space<vmem>>, vector<8x1xf32>
    %c0_21 = arith.constant 0 : index
    %c0_22 = arith.constant 0 : index
    %11 = vector.load %arg11[%c0_21, %c0_22] : memref<8x1xf32, #tpu.memory_space<vmem>>, vector<8x1xf32>
    %c0_23 = arith.constant 0 : index
    %c0_24 = arith.constant 0 : index
    %12 = vector.load %arg13[%c0_23, %c0_24] : memref<8x1xf32, #tpu.memory_space<vmem>>, vector<8x1xf32>
    %c0_25 = arith.constant 0 : index
    %c0_26 = arith.constant 0 : index
    %13 = vector.load %arg15[%c0_25, %c0_26] : memref<8x1xf32, #tpu.memory_space<vmem>>, vector<8x1xf32>
    %c0_i32 = arith.constant 0 : i32
    %c128_i32 = arith.constant 128 : i32
    %14 = arith.muli %c0_i32, %c128_i32 : i32
    %15 = tpu.assume_multiple %14, 128 : i32
    %c0_27 = arith.constant 0 : index
    %16 = arith.index_cast %15 : i32 to index
    %17 = vector.load %arg1[%c0_27, %16] : memref<8x128xf32, #tpu.memory_space<vmem>>, vector<8x128xf32>
    %18 = arith.truncf %17 : vector<8x128xf32> to vector<8x128xbf16>
    %cst = arith.constant dense<0.000000e+00> : vector<64x128xf32>
    %19 = tpu.matmul %0, %18, %cst {dimension_numbers = #tpu.dot_dimension_numbers<[1], [0], [0], [1], [0, 0, 1, 1], [], []>} : vector<64x8xbf16>, vector<8x128xbf16>, vector<64x128xf32> -> vector<64x128xf32>
    %20 = vector.broadcast %7 : vector<64x1xf32> to vector<64x128xf32>
    %21 = arith.addf %19, %20 : vector<64x128xf32>
    %cst_28 = arith.constant 0.00999999977 : f32
    %22 = vector.broadcast %cst_28 : f32 to vector<64x128xf32>
    %23 = arith.mulf %22, %21 : vector<64x128xf32>
    %24 = arith.maximumf %21, %23 : vector<64x128xf32>
    %25 = arith.truncf %24 : vector<64x128xf32> to vector<64x128xbf16>
    %cst_29 = arith.constant dense<0.000000e+00> : vector<32x128xf32>
    %26 = tpu.matmul %1, %25, %cst_29 {dimension_numbers = #tpu.dot_dimension_numbers<[1], [0], [0], [1], [0, 0, 1, 1], [], []>} : vector<32x64xbf16>, vector<64x128xbf16>, vector<32x128xf32> -> vector<32x128xf32>
    %27 = vector.broadcast %8 : vector<32x1xf32> to vector<32x128xf32>
    %28 = arith.addf %26, %27 : vector<32x128xf32>
    %cst_30 = arith.constant 0.00999999977 : f32
    %29 = vector.broadcast %cst_30 : f32 to vector<32x128xf32>
    %30 = arith.mulf %29, %28 : vector<32x128xf32>
    %31 = arith.maximumf %28, %30 : vector<32x128xf32>
    %32 = arith.truncf %31 : vector<32x128xf32> to vector<32x128xbf16>
    %cst_31 = arith.constant dense<0.000000e+00> : vector<16x128xf32>
    %33 = tpu.matmul %2, %32, %cst_31 {dimension_numbers = #tpu.dot_dimension_numbers<[1], [0], [0], [1], [0, 0, 1, 1], [], []>} : vector<16x32xbf16>, vector<32x128xbf16>, vector<16x128xf32> -> vector<16x128xf32>
    %34 = vector.broadcast %9 : vector<16x1xf32> to vector<16x128xf32>
    %35 = arith.addf %33, %34 : vector<16x128xf32>
    %cst_32 = arith.constant 0.00999999977 : f32
    %36 = vector.broadcast %cst_32 : f32 to vector<16x128xf32>
    %37 = arith.mulf %36, %35 : vector<16x128xf32>
    %38 = arith.maximumf %35, %37 : vector<16x128xf32>
    %39 = arith.truncf %38 : vector<16x128xf32> to vector<16x128xbf16>
    %cst_33 = arith.constant dense<0.000000e+00> : vector<8x128xf32>
    %40 = tpu.matmul %3, %39, %cst_33 {dimension_numbers = #tpu.dot_dimension_numbers<[1], [0], [0], [1], [0, 0, 1, 1], [], []>} : vector<8x16xbf16>, vector<16x128xbf16>, vector<8x128xf32> -> vector<8x128xf32>
    %41 = vector.broadcast %10 : vector<8x1xf32> to vector<8x128xf32>
    %42 = arith.addf %40, %41 : vector<8x128xf32>
    %cst_34 = arith.constant 0.00999999977 : f32
    %43 = vector.broadcast %cst_34 : f32 to vector<8x128xf32>
    %44 = arith.mulf %43, %42 : vector<8x128xf32>
    %45 = arith.maximumf %42, %44 : vector<8x128xf32>
    %46 = arith.truncf %45 : vector<8x128xf32> to vector<8x128xbf16>
    %cst_35 = arith.constant dense<0.000000e+00> : vector<8x128xf32>
    %47 = tpu.matmul %4, %46, %cst_35 {dimension_numbers = #tpu.dot_dimension_numbers<[1], [0], [0], [1], [0, 0, 1, 1], [], []>} : vector<8x8xbf16>, vector<8x128xbf16>, vector<8x128xf32> -> vector<8x128xf32>
    %48 = vector.broadcast %11 : vector<8x1xf32> to vector<8x128xf32>
    %49 = arith.addf %47, %48 : vector<8x128xf32>
    %cst_36 = arith.constant 0.00999999977 : f32
    %50 = vector.broadcast %cst_36 : f32 to vector<8x128xf32>
    %51 = arith.mulf %50, %49 : vector<8x128xf32>
    %52 = arith.maximumf %49, %51 : vector<8x128xf32>
    %53 = arith.truncf %52 : vector<8x128xf32> to vector<8x128xbf16>
    %cst_37 = arith.constant dense<0.000000e+00> : vector<8x128xf32>
    %54 = tpu.matmul %5, %53, %cst_37 {dimension_numbers = #tpu.dot_dimension_numbers<[1], [0], [0], [1], [0, 0, 1, 1], [], []>} : vector<8x8xbf16>, vector<8x128xbf16>, vector<8x128xf32> -> vector<8x128xf32>
    %55 = vector.broadcast %12 : vector<8x1xf32> to vector<8x128xf32>
    %56 = arith.addf %54, %55 : vector<8x128xf32>
    %cst_38 = arith.constant 0.00999999977 : f32
    %57 = vector.broadcast %cst_38 : f32 to vector<8x128xf32>
    %58 = arith.mulf %57, %56 : vector<8x128xf32>
    %59 = arith.maximumf %56, %58 : vector<8x128xf32>
    %60 = arith.truncf %59 : vector<8x128xf32> to vector<8x128xbf16>
    %cst_39 = arith.constant dense<0.000000e+00> : vector<8x128xf32>
    %61 = tpu.matmul %6, %60, %cst_39 {dimension_numbers = #tpu.dot_dimension_numbers<[1], [0], [0], [1], [0, 0, 1, 1], [], []>} : vector<8x8xbf16>, vector<8x128xbf16>, vector<8x128xf32> -> vector<8x128xf32>
    %62 = vector.broadcast %13 : vector<8x1xf32> to vector<8x128xf32>
    %63 = arith.addf %61, %62 : vector<8x128xf32>
    %cst_40 = arith.constant 0.00999999977 : f32
    %64 = vector.broadcast %cst_40 : f32 to vector<8x128xf32>
    %65 = arith.mulf %64, %63 : vector<8x128xf32>
    %66 = arith.maximumf %63, %65 : vector<8x128xf32>
    %67 = vector.extract_strided_slice %66 {offsets = [0, 0], sizes = [1, 128], strides = [1, 1]} : vector<8x128xf32> to vector<1x128xf32>
    %c0_41 = arith.constant 0 : index
    %68 = arith.index_cast %15 : i32 to index
    %69 = vector.load %arg16[%c0_41, %68] : memref<1x128xf32, #tpu.memory_space<vmem>>, vector<1x128xf32>
    tpu.vector_store %arg16[%c0_41, %68], %67 {strides = array<i32>} : memref<1x128xf32, #tpu.memory_space<vmem>>, vector<1x128xf32>,
    %c1_i32 = arith.constant 1 : i32
    return
  }
  func.func @transform_0(%arg0: i32) -> (i32, i32) {
    %c0_i32 = arith.constant 0 : i32
    %c0_i32_0 = arith.constant 0 : i32
    return %c0_i32, %arg0 : i32, i32
  }
  func.func @transform_1(%arg0: i32) -> (i32, i32) {
    %c0_i32 = arith.constant 0 : i32
    %c0_i32_0 = arith.constant 0 : i32
    %c0_i32_1 = arith.constant 0 : i32
    return %c0_i32, %c0_i32_0 : i32, i32
  }
  func.func @transform_2(%arg0: i32) -> (i32, i32) {
    %c0_i32 = arith.constant 0 : i32
    %c0_i32_0 = arith.constant 0 : i32
    %c0_i32_1 = arith.constant 0 : i32
    return %c0_i32, %c0_i32_0 : i32, i32
  }
  func.func @transform_3(%arg0: i32) -> (i32, i32) {
    %c0_i32 = arith.constant 0 : i32
    %c0_i32_0 = arith.constant 0 : i32
    %c0_i32_1 = arith.constant 0 : i32
    return %c0_i32, %c0_i32_0 : i32, i32
  }
  func.func @transform_4(%arg0: i32) -> (i32, i32) {
    %c0_i32 = arith.constant 0 : i32
    %c0_i32_0 = arith.constant 0 : i32
    %c0_i32_1 = arith.constant 0 : i32
    return %c0_i32, %c0_i32_0 : i32, i32
  }
  func.func @transform_5(%arg0: i32) -> (i32, i32) {
    %c0_i32 = arith.constant 0 : i32
    %c0_i32_0 = arith.constant 0 : i32
    %c0_i32_1 = arith.constant 0 : i32
    return %c0_i32, %c0_i32_0 : i32, i32
  }
  func.func @transform_6(%arg0: i32) -> (i32, i32) {
    %c0_i32 = arith.constant 0 : i32
    %c0_i32_0 = arith.constant 0 : i32
    %c0_i32_1 = arith.constant 0 : i32
    return %c0_i32, %c0_i32_0 : i32, i32
  }
  func.func @transform_7(%arg0: i32) -> (i32, i32) {
    %c0_i32 = arith.constant 0 : i32
    %c0_i32_0 = arith.constant 0 : i32
    %c0_i32_1 = arith.constant 0 : i32
    return %c0_i32, %c0_i32_0 : i32, i32
  }
  func.func @transform_8(%arg0: i32) -> (i32, i32) {
    %c0_i32 = arith.constant 0 : i32
    %c0_i32_0 = arith.constant 0 : i32
    %c0_i32_1 = arith.constant 0 : i32
    return %c0_i32, %c0_i32_0 : i32, i32
  }
  func.func @transform_9(%arg0: i32) -> (i32, i32) {
    %c0_i32 = arith.constant 0 : i32
    %c0_i32_0 = arith.constant 0 : i32
    %c0_i32_1 = arith.constant 0 : i32
    return %c0_i32, %c0_i32_0 : i32, i32
  }
  func.func @transform_10(%arg0: i32) -> (i32, i32) {
    %c0_i32 = arith.constant 0 : i32
    %c0_i32_0 = arith.constant 0 : i32
    %c0_i32_1 = arith.constant 0 : i32
    return %c0_i32, %c0_i32_0 : i32, i32
  }
  func.func @transform_11(%arg0: i32) -> (i32, i32) {
    %c0_i32 = arith.constant 0 : i32
    %c0_i32_0 = arith.constant 0 : i32
    %c0_i32_1 = arith.constant 0 : i32
    return %c0_i32, %c0_i32_0 : i32, i32
  }
  func.func @transform_12(%arg0: i32) -> (i32, i32) {
    %c0_i32 = arith.constant 0 : i32
    %c0_i32_0 = arith.constant 0 : i32
    %c0_i32_1 = arith.constant 0 : i32
    return %c0_i32, %c0_i32_0 : i32, i32
  }
  func.func @transform_13(%arg0: i32) -> (i32, i32) {
    %c0_i32 = arith.constant 0 : i32
    %c0_i32_0 = arith.constant 0 : i32
    %c0_i32_1 = arith.constant 0 : i32
    return %c0_i32, %c0_i32_0 : i32, i32
  }
  func.func @transform_14(%arg0: i32) -> (i32, i32) {
    %c0_i32 = arith.constant 0 : i32
    %c0_i32_0 = arith.constant 0 : i32
    %c0_i32_1 = arith.constant 0 : i32
    return %c0_i32, %c0_i32_0 : i32, i32
  }
  func.func @transform_15(%arg0: i32) -> (i32, i32) {
    %c0_i32 = arith.constant 0 : i32
    %c0_i32_0 = arith.constant 0 : i32
    return %c0_i32, %arg0 : i32, i32
  }
}

</mosaic_0001>

<llo_original>
// kernel: tpu_custom_call.1
$region0: #{tpu_custom_call.1}
  #allocation0 [shape = 'u32[]', space=smem, size = 0x4, offset = 0x4, fixed_abs, tag = 'smem constant byte address 0x4 - core index']
  #allocation1 [shape = 'u32[144,128]{1,0:T(1,128)}', space=vmem, size = 0x12000, scoped, tag = 'internal scratch']
  %s0 = inlined_call_operand.vmem [shape: f32[8,128], index: 0, kind: input, shape index: {}]
  %s1 = inlined_call_operand.vmem [shape: bf16[64,8], index: 1, kind: input, shape index: {}]
  %s2 = inlined_call_operand.vmem [shape: f32[64,1], index: 2, kind: input, shape index: {}]
  %s3 = inlined_call_operand.vmem [shape: bf16[32,64], index: 3, kind: input, shape index: {}]
  %s4 = inlined_call_operand.vmem [shape: f32[32,1], index: 4, kind: input, shape index: {}]
  %s5 = inlined_call_operand.vmem [shape: bf16[16,32], index: 5, kind: input, shape index: {}]
  %s6 = inlined_call_operand.vmem [shape: f32[16,1], index: 6, kind: input, shape index: {}]
  %s7 = inlined_call_operand.vmem [shape: bf16[8,16], index: 7, kind: input, shape index: {}]
  %s8 = inlined_call_operand.vmem [shape: f32[8,1], index: 8, kind: input, shape index: {}]
  %s9 = inlined_call_operand.vmem [shape: bf16[8,8], index: 9, kind: input, shape index: {}]
  %s10 = inlined_call_operand.vmem [shape: f32[8,1], index: 10, kind: input, shape index: {}]
  %s11 = inlined_call_operand.vmem [shape: bf16[8,8], index: 11, kind: input, shape index: {}]
  %s12 = inlined_call_operand.vmem [shape: f32[8,1], index: 12, kind: input, shape index: {}]
  %s13 = inlined_call_operand.vmem [shape: bf16[8,8], index: 13, kind: input, shape index: {}]
  %s14 = inlined_call_operand.vmem [shape: f32[8,1], index: 14, kind: input, shape index: {}]
  %s15 = inlined_call_operand.hbm [shape: f32[1,128], index: 15, kind: output, shape index: {}]
  %s16 = sld [smem:[#allocation0]]
  $region70: #{tpu_custom_call.1} parent=0
    _
  %s18 = ssub.s32 1, %s16
  %s19 = scalar_select 0, %s18, %s16
  $region1: #{tpu_custom_call.1} parent=0
    #allocation2 [shape = 'u8[512]{0}', space=vmem, size = 0x400, scoped, tag = 'output window, operand 0, single buffered']
    #allocation3 [shape = 's32[1]{0}', space=sflag, size = 0x4, scoped, tag = 'scoped memory for tpu_custom_call.1']
    %20 = vsyncpa [#allocation3], 0
    // Predicated region
    $region2: #{tpu_custom_call.1} parent=1 // pred_check
      _
    $region3: #{tpu_custom_call.1} parent=1 // pred_check_branch
      %22 = sbr.rel (0) target = $region5
    $region4: #{tpu_custom_call.1} parent=1 // pred_region
      _
    $region5: #{tpu_custom_call.1} parent=1 // pred_fallthru
      _
    // Predicated region
    $region6: #{tpu_custom_call.1} parent=1 // pred_check
      _
    $region7: #{tpu_custom_call.1} parent=1 // pred_check_branch
      %24 = sbr.rel (0) target = $region9
    $region8: #{tpu_custom_call.1} parent=1 // pred_region
      _
    $region9: #{tpu_custom_call.1} parent=1 // pred_fallthru
      _
    // Predicated region
    $region10: #{tpu_custom_call.1} parent=1 // pred_check
      _
    $region11: #{tpu_custom_call.1} parent=1 // pred_check_branch
      %26 = sbr.rel (0) target = $region13
    $region12: #{tpu_custom_call.1} parent=1 // pred_region
      _
    $region13: #{tpu_custom_call.1} parent=1 // pred_fallthru
      _
    // Predicated region
    $region14: #{tpu_custom_call.1} parent=1 // pred_check
      _
    $region15: #{tpu_custom_call.1} parent=1 // pred_check_branch
      %28 = sbr.rel (0) target = $region17
    $region16: #{tpu_custom_call.1} parent=1 // pred_region
      _
    $region17: #{tpu_custom_call.1} parent=1 // pred_fallthru
      _
    // Predicated region
    $region18: #{tpu_custom_call.1} parent=1 // pred_check
      _
    $region19: #{tpu_custom_call.1} parent=1 // pred_check_branch
      %30 = sbr.rel (0) target = $region21
    $region20: #{tpu_custom_call.1} parent=1 // pred_region
      _
    $region21: #{tpu_custom_call.1} parent=1 // pred_fallthru
      _
    // Predicated region
    $region22: #{tpu_custom_call.1} parent=1 // pred_check
      _
    $region23: #{tpu_custom_call.1} parent=1 // pred_check_branch
      %32 = sbr.rel (0) target = $region25
    $region24: #{tpu_custom_call.1} parent=1 // pred_region
      _
    $region25: #{tpu_custom_call.1} parent=1 // pred_fallthru
      _
    // Predicated region
    $region26: #{tpu_custom_call.1} parent=1 // pred_check
      _
    $region27: #{tpu_custom_call.1} parent=1 // pred_check_branch
      %34 = sbr.rel (0) target = $region29
    $region28: #{tpu_custom_call.1} parent=1 // pred_region
      _
    $region29: #{tpu_custom_call.1} parent=1 // pred_fallthru
      _
    // Predicated region
    $region30: #{tpu_custom_call.1} parent=1 // pred_check
      _
    $region31: #{tpu_custom_call.1} parent=1 // pred_check_branch
      %36 = sbr.rel (0) target = $region33
    $region32: #{tpu_custom_call.1} parent=1 // pred_region
      _
    $region33: #{tpu_custom_call.1} parent=1 // pred_fallthru
      _
    // Predicated region
    $region34: #{tpu_custom_call.1} parent=1 // pred_check
      _
    $region35: #{tpu_custom_call.1} parent=1 // pred_check_branch
      %38 = sbr.rel (0) target = $region37
    $region36: #{tpu_custom_call.1} parent=1 // pred_region
      _
    $region37: #{tpu_custom_call.1} parent=1 // pred_fallthru
      _
    // Predicated region
    $region38: #{tpu_custom_call.1} parent=1 // pred_check
      _
    $region39: #{tpu_custom_call.1} parent=1 // pred_check_branch
      %40 = sbr.rel (0) target = $region41
    $region40: #{tpu_custom_call.1} parent=1 // pred_region
      _
    $region41: #{tpu_custom_call.1} parent=1 // pred_fallthru
      _
    // Predicated region
    $region42: #{tpu_custom_call.1} parent=1 // pred_check
      _
    $region43: #{tpu_custom_call.1} parent=1 // pred_check_branch
      %42 = sbr.rel (0) target = $region45
    $region44: #{tpu_custom_call.1} parent=1 // pred_region
      _
    $region45: #{tpu_custom_call.1} parent=1 // pred_fallthru
      _
    // Predicated region
    $region46: #{tpu_custom_call.1} parent=1 // pred_check
      _
    $region47: #{tpu_custom_call.1} parent=1 // pred_check_branch
      %44 = sbr.rel (0) target = $region49
    $region48: #{tpu_custom_call.1} parent=1 // pred_region
      _
    $region49: #{tpu_custom_call.1} parent=1 // pred_fallthru
      _
    // Predicated region
    $region50: #{tpu_custom_call.1} parent=1 // pred_check
      _
    $region51: #{tpu_custom_call.1} parent=1 // pred_check_branch
      %46 = sbr.rel (0) target = $region53
    $region52: #{tpu_custom_call.1} parent=1 // pred_region
      _
    $region53: #{tpu_custom_call.1} parent=1 // pred_fallthru
      _
    // Predicated region
    $region54: #{tpu_custom_call.1} parent=1 // pred_check
      _
    $region55: #{tpu_custom_call.1} parent=1 // pred_check_branch
      %48 = sbr.rel (0) target = $region57
    $region56: #{tpu_custom_call.1} parent=1 // pred_region
      _
    $region57: #{tpu_custom_call.1} parent=1 // pred_fallthru
      _
    // Predicated region
    $region58: #{tpu_custom_call.1} parent=1 // pred_check
      _
    $region59: #{tpu_custom_call.1} parent=1 // pred_check_branch
      %50 = sbr.rel (0) target = $region61
    $region60: #{tpu_custom_call.1} parent=1 // pred_region
      _
    $region61: #{tpu_custom_call.1} parent=1 // pred_fallthru
      _
    %v52 = vld [vmem:[%s1] sm:$0xf]
    %v53 = vld [vmem:[%s1 + $0x4] sm:$0xf]
    %v54 = vld [vmem:[%s1 + $0x8] sm:$0xf]
    %v55 = vld [vmem:[%s1 + $0xc] sm:$0xf]
    %v56 = vld [vmem:[%s1 + $0x10] sm:$0xf]
    %v57 = vld [vmem:[%s1 + $0x14] sm:$0xf]
    %v58 = vld [vmem:[%s1 + $0x18] sm:$0xf]
    %v59 = vld [vmem:[%s1 + $0x1c] sm:$0xf]
    %v60 = vld [vmem:[%s3] sm:$0xf]
    %v61 = vld [vmem:[%s3 + $0x4] sm:$0xf]
    %v62 = vld [vmem:[%s3 + $0x8] sm:$0xf]
    %v63 = vld [vmem:[%s3 + $0xc] sm:$0xf]
    %v64 = vld [vmem:[%s5] sm:$0xf]
    %v65 = vld [vmem:[%s5 + $0x4] sm:$0xf]
    %v66 = vld [vmem:[%s7] sm:$0xf]
    %v67 = vld [vmem:[%s9] sm:$0xf]
    %v68 = vld [vmem:[%s11] sm:$0xf]
    %v69 = vld [vmem:[%s13] sm:$0xf]
    %v70 = vld [vmem:[%s2] sm:$0xff]
    %v71 = vld [vmem:[%s2 + $0x8] sm:$0xff]
    %v72 = vld [vmem:[%s2 + $0x10] sm:$0xff]
    %v73 = vld [vmem:[%s2 + $0x18] sm:$0xff]
    %v74 = vld [vmem:[%s2 + $0x20] sm:$0xff]
    %v75 = vld [vmem:[%s2 + $0x28] sm:$0xff]
    %v76 = vld [vmem:[%s2 + $0x30] sm:$0xff]
    %v77 = vld [vmem:[%s2 + $0x38] sm:$0xff]
    %v78 = vld [vmem:[%s4] sm:$0xff]
    %v79 = vld [vmem:[%s4 + $0x8] sm:$0xff]
    %v80 = vld [vmem:[%s4 + $0x10] sm:$0xff]
    %v81 = vld [vmem:[%s4 + $0x18] sm:$0xff]
    %v82 = vld [vmem:[%s6] sm:$0xff]
    %v83 = vld [vmem:[%s6 + $0x8] sm:$0xff]
    %v84 = vld [vmem:[%s8] sm:$0xff]
    %v85 = vld [vmem:[%s10] sm:$0xff]
    %v86 = vld [vmem:[%s12] sm:$0xff]
    %v87 = vld [vmem:[%s14] sm:$0xff]
    %v88 = vld [vmem:[%s0] sm:$0xff]
    %v89 = vpack.c.bf16 %v88, %v88
    %91 = vset.pattern.permute.xlu0 0
    %92 = vperm.xlu0 %91, %v70
    %v93 = vpop.permute.xlu0 %92
    %96 = vset.pattern.permute.xlu0 0
    %97 = vperm.xlu0 %96, %v71
    %v98 = vpop.permute.xlu0 %97
    %101 = vset.pattern.permute.xlu0 0
    %102 = vperm.xlu0 %101, %v72
    %v103 = vpop.permute.xlu0 %102
    %106 = vset.pattern.permute.xlu0 0
    %107 = vperm.xlu0 %106, %v73
    %v108 = vpop.permute.xlu0 %107
    %111 = vset.pattern.permute.xlu0 0
    %112 = vperm.xlu0 %111, %v74
    %v113 = vpop.permute.xlu0 %112
    %116 = vset.pattern.permute.xlu0 0
    %117 = vperm.xlu0 %116, %v75
    %v118 = vpop.permute.xlu0 %117
    %121 = vset.pattern.permute.xlu0 0
    %122 = vperm.xlu0 %121, %v76
    %v123 = vpop.permute.xlu0 %122
    %126 = vset.pattern.permute.xlu0 0
    %127 = vperm.xlu0 %126, %v77
    %v128 = vpop.permute.xlu0 %127
    %v138 = vunpack.c.l.b16 %v52
    %v139 = vunpack.c.l.b16 %v53
    %v140 = vunpack.c.l.b16 %v54
    %v141 = vunpack.c.l.b16 %v55
    %v142 = vunpack.c.l.b16 %v56
    %v143 = vunpack.c.l.b16 %v57
    %v144 = vunpack.c.l.b16 %v58
    %v145 = vunpack.c.l.b16 %v59
    %v146 = vpack.c.b16 %v139, %v138
    %v147 = vpack.c.b16 %v141, %v140
    %v148 = vpack.c.b16 %v143, %v142
    %v149 = vpack.c.b16 %v145, %v144
    %vm150 = vcmask 64512
    %v152 = vsel %vm150, %v146, 0
    %v155 = vsel %vm150, %v147, 0
    %v158 = vsel %vm150, %v148, 0
    %v161 = vsel %vm150, %v149, 0
    %vm163 = vcmask 1043456
    %v165 = vsel %vm163, %v89, 0
    %167 = vmatprep.subr.bf16.mxu0 0
    %168 = vmatpush1.bf16.msra.mxu0 %v165
    %169 = vmatprep.subr.bf16.mxu0 0
    %170 = vmatpush1.bf16.msra.mxu0 0
    %171 = vmatprep.subr.bf16.mxu0 0
    %172 = vmatpush1.bf16.msra.mxu0 0
    %173 = vmatprep.subr.bf16.mxu0 0
    %174 = vmatpush1.bf16.msra.mxu0 0
    %175 = vmatprep.subr.bf16.mxu0 0
    %176 = vmatpush1.bf16.msra.mxu0 0
    %177 = vmatprep.subr.bf16.mxu0 0
    %178 = vmatpush1.bf16.msra.mxu0 0
    %179 = vmatprep.subr.bf16.mxu0 0
    %180 = vmatpush1.bf16.msra.mxu0 0
    %181 = vmatprep.subr.bf16.mxu0 0
    %182 = vmatpush1.bf16.msra.mxu0 0
    %183 = vmatprep.subr.bf16.mxu0 0
    %184 = vmatpush1.bf16.msra.mxu0 0
    %185 = vmatprep.subr.bf16.mxu0 0
    %186 = vmatpush1.bf16.msra.mxu0 0
    %187 = vmatprep.subr.bf16.mxu0 0
    %188 = vmatpush1.bf16.msra.mxu0 0
    %189 = vmatprep.subr.bf16.mxu0 0
    %190 = vmatpush1.bf16.msra.mxu0 0
    %191 = vmatprep.subr.bf16.mxu0 0
    %192 = vmatpush1.bf16.msra.mxu0 0
    %193 = vmatprep.subr.bf16.mxu0 0
    %194 = vmatpush1.bf16.msra.mxu0 0
    %195 = vmatprep.subr.bf16.mxu0 0
    %196 = vmatpush1.bf16.msra.mxu0 0
    %197 = vmatprep.subr.bf16.mxu0 0
    %198 = vmatpush1.bf16.msra.mxu0 0
    %199 = vmatprep.mubr.bf16.mxu0 0
    %200 = vmatmul.mubr.bf16.gmra.mrb[0].mxu0 %v152
    %v201 = vpop.f32.mrb[0].mxu0
    %v202 = vadd.f32 %v93, %v201
    %v203 = vpop.f32.mrb[0].mxu0
    %v204 = vpop.f32.mrb[0].mxu0
    %v205 = vadd.f32 %v98, %v204
    %v206 = vpop.f32.mrb[0].mxu0
    %207 = vmatprep.mubr.bf16.mxu0 0
    %208 = vmatmul.mubr.bf16.gmra.mrb[0].mxu0 %v155
    %v209 = vpop.f32.mrb[0].mxu0
    %v210 = vadd.f32 %v103, %v209
    %v211 = vpop.f32.mrb[0].mxu0
    %v212 = vpop.f32.mrb[0].mxu0
    %v213 = vadd.f32 %v108, %v212
    %v214 = vpop.f32.mrb[0].mxu0
    %215 = vmatprep.mubr.bf16.mxu0 0
    %216 = vmatmul.mubr.bf16.gmra.mrb[0].mxu0 %v158
    %v217 = vpop.f32.mrb[0].mxu0
    %v218 = vadd.f32 %v113, %v217
    %v219 = vpop.f32.mrb[0].mxu0
    %v220 = vpop.f32.mrb[0].mxu0
    %v221 = vadd.f32 %v118, %v220
    %v222 = vpop.f32.mrb[0].mxu0
    %223 = vmatprep.mubr.bf16.mxu0 0
    %224 = vmatmul.mubr.bf16.gmra.mrb[0].mxu0 %v161
    %v225 = vpop.f32.mrb[0].mxu0
    %v226 = vadd.f32 %v123, %v225
    %v227 = vpop.f32.mrb[0].mxu0
    %v228 = vpop.f32.mrb[0].mxu0
    %v229 = vadd.f32 %v128, %v228
    %v230 = vpop.f32.mrb[0].mxu0
    %231 = vdwg.mxu0
    %v232 = vmul.f32 %v202, 0.01
    %v233 = vmul.f32 %v205, 0.01
    %v234 = vmul.f32 %v210, 0.01
    %v235 = vmul.f32 %v213, 0.01
    %v236 = vmul.f32 %v218, 0.01
    %v237 = vmul.f32 %v221, 0.01
    %v238 = vmul.f32 %v226, 0.01
    %v239 = vmul.f32 %v229, 0.01
    %v240 = vmax.f32 %v202, %v232
    %v241 = vmax.f32 %v205, %v233
    %v242 = vmax.f32 %v210, %v234
    %v243 = vmax.f32 %v213, %v235
    %v244 = vmax.f32 %v218, %v236
    %v245 = vmax.f32 %v221, %v237
    %v246 = vmax.f32 %v226, %v238
    %v247 = vmax.f32 %v229, %v239
    %v248 = vpack.c.bf16 %v241, %v240
    %v249 = vpack.c.bf16 %v243, %v242
    %v250 = vpack.c.bf16 %v245, %v244
    %v251 = vpack.c.bf16 %v247, %v246
    %253 = vset.pattern.permute.xlu0 0
    %254 = vperm.xlu0 %253, %v78
    %v255 = vpop.permute.xlu0 %254
    %258 = vset.pattern.permute.xlu0 0
    %259 = vperm.xlu0 %258, %v79
    %v260 = vpop.permute.xlu0 %259
    %263 = vset.pattern.permute.xlu0 0
    %264 = vperm.xlu0 %263, %v80
    %v265 = vpop.permute.xlu0 %264
    %268 = vset.pattern.permute.xlu0 0
    %269 = vperm.xlu0 %268, %v81
    %v270 = vpop.permute.xlu0 %269
    %v276 = vunpack.c.l.b16 %v60
    %v277 = vunpack.c.l.b16 %v61
    %v278 = vunpack.c.l.b16 %v62
    %v279 = vunpack.c.l.b16 %v63
    %v280 = vpack.c.b16 %v277, %v276
    %v281 = vpack.c.b16 %v279, %v278
    %vm282 = vcmask 523264
    %v284 = vsel %vm282, %v280, 0
    %v287 = vsel %vm282, %v281, 0
    %289 = vmatprep.subr.bf16.mxu0 0
    %290 = vmatpush1.bf16.msra.mxu0 %v248
    %291 = vmatprep.subr.bf16.mxu0 0
    %292 = vmatpush1.bf16.msra.mxu0 %v249
    %293 = vmatprep.subr.bf16.mxu0 0
    %294 = vmatpush1.bf16.msra.mxu0 %v250
    %295 = vmatprep.subr.bf16.mxu0 0
    %296 = vmatpush1.bf16.msra.mxu0 %v251
    %297 = vmatprep.subr.bf16.mxu0 0
    %298 = vmatpush1.bf16.msra.mxu0 0
    %299 = vmatprep.subr.bf16.mxu0 0
    %300 = vmatpush1.bf16.msra.mxu0 0
    %301 = vmatprep.subr.bf16.mxu0 0
    %302 = vmatpush1.bf16.msra.mxu0 0
    %303 = vmatprep.subr.bf16.mxu0 0
    %304 = vmatpush1.bf16.msra.mxu0 0
    %305 = vmatprep.subr.bf16.mxu0 0
    %306 = vmatpush1.bf16.msra.mxu0 0
    %307 = vmatprep.subr.bf16.mxu0 0
    %308 = vmatpush1.bf16.msra.mxu0 0
    %309 = vmatprep.subr.bf16.mxu0 0
    %310 = vmatpush1.bf16.msra.mxu0 0
    %311 = vmatprep.subr.bf16.mxu0 0
    %312 = vmatpush1.bf16.msra.mxu0 0
    %313 = vmatprep.subr.bf16.mxu0 0
    %314 = vmatpush1.bf16.msra.mxu0 0
    %315 = vmatprep.subr.bf16.mxu0 0
    %316 = vmatpush1.bf16.msra.mxu0 0
    %317 = vmatprep.subr.bf16.mxu0 0
    %318 = vmatpush1.bf16.msra.mxu0 0
    %319 = vmatprep.subr.bf16.mxu0 0
    %320 = vmatpush1.bf16.msra.mxu0 0
    %321 = vmatprep.mubr.bf16.mxu0 0
    %322 = vmatmul.mubr.bf16.gmra.mrb[0].mxu0 %v284
    %v323 = vpop.f32.mrb[0].mxu0
    %v324 = vadd.f32 %v255, %v323
    %v325 = vpop.f32.mrb[0].mxu0
    %v326 = vpop.f32.mrb[0].mxu0
    %v327 = vadd.f32 %v260, %v326
    %v328 = vpop.f32.mrb[0].mxu0
    %329 = vmatprep.mubr.bf16.mxu0 0
    %330 = vmatmul.mubr.bf16.gmra.mrb[0].mxu0 %v287
    %v331 = vpop.f32.mrb[0].mxu0
    %v332 = vadd.f32 %v265, %v331
    %v333 = vpop.f32.mrb[0].mxu0
    %v334 = vpop.f32.mrb[0].mxu0
    %v335 = vadd.f32 %v270, %v334
    %v336 = vpop.f32.mrb[0].mxu0
    %337 = vdwg.mxu0
    %v338 = vmul.f32 %v324, 0.01
    %v339 = vmul.f32 %v327, 0.01
    %v340 = vmul.f32 %v332, 0.01
    %v341 = vmul.f32 %v335, 0.01
    %v342 = vmax.f32 %v324, %v338
    %v343 = vmax.f32 %v327, %v339
    %v344 = vmax.f32 %v332, %v340
    %v345 = vmax.f32 %v335, %v341
    %v346 = vpack.c.bf16 %v343, %v342
    %v347 = vpack.c.bf16 %v345, %v344
    %349 = vset.pattern.permute.xlu0 0
    %350 = vperm.xlu0 %349, %v82
    %v351 = vpop.permute.xlu0 %350
    %354 = vset.pattern.permute.xlu0 0
    %355 = vperm.xlu0 %354, %v83
    %v356 = vpop.permute.xlu0 %355
    %v360 = vunpack.c.l.b16 %v64
    %v361 = vunpack.c.l.b16 %v65
    %v362 = vpack.c.b16 %v361, %v360
    %vm363 = vcmask 261120
    %v365 = vsel %vm363, %v362, 0
    %367 = vmatprep.subr.bf16.mxu0 0
    %368 = vmatpush1.bf16.msra.mxu0 %v346
    %369 = vmatprep.subr.bf16.mxu0 0
    %370 = vmatpush1.bf16.msra.mxu0 %v347
    %371 = vmatprep.subr.bf16.mxu0 0
    %372 = vmatpush1.bf16.msra.mxu0 0
    %373 = vmatprep.subr.bf16.mxu0 0
    %374 = vmatpush1.bf16.msra.mxu0 0
    %375 = vmatprep.subr.bf16.mxu0 0
    %376 = vmatpush1.bf16.msra.mxu0 0
    %377 = vmatprep.subr.bf16.mxu0 0
    %378 = vmatpush1.bf16.msra.mxu0 0
    %379 = vmatprep.subr.bf16.mxu0 0
    %380 = vmatpush1.bf16.msra.mxu0 0
    %381 = vmatprep.subr.bf16.mxu0 0
    %382 = vmatpush1.bf16.msra.mxu0 0
    %383 = vmatprep.subr.bf16.mxu0 0
    %384 = vmatpush1.bf16.msra.mxu0 0
    %385 = vmatprep.subr.bf16.mxu0 0
    %386 = vmatpush1.bf16.msra.mxu0 0
    %387 = vmatprep.subr.bf16.mxu0 0
    %388 = vmatpush1.bf16.msra.mxu0 0
    %389 = vmatprep.subr.bf16.mxu0 0
    %390 = vmatpush1.bf16.msra.mxu0 0
    %391 = vmatprep.subr.bf16.mxu0 0
    %392 = vmatpush1.bf16.msra.mxu0 0
    %393 = vmatprep.subr.bf16.mxu0 0
    %394 = vmatpush1.bf16.msra.mxu0 0
    %395 = vmatprep.subr.bf16.mxu0 0
    %396 = vmatpush1.bf16.msra.mxu0 0
    %397 = vmatprep.subr.bf16.mxu0 0
    %398 = vmatpush1.bf16.msra.mxu0 0
    %399 = vmatprep.mubr.bf16.mxu0 0
    %400 = vmatmul.mubr.bf16.gmra.mrb[0].mxu0 %v365
    %v401 = vpop.f32.mrb[0].mxu0
    %v402 = vadd.f32 %v351, %v401
    %v403 = vpop.f32.mrb[0].mxu0
    %v404 = vpop.f32.mrb[0].mxu0
    %v405 = vadd.f32 %v356, %v404
    %v406 = vpop.f32.mrb[0].mxu0
    %407 = vdwg.mxu0
    %v408 = vmul.f32 %v402, 0.01
    %v409 = vmul.f32 %v405, 0.01
    %v410 = vmax.f32 %v402, %v408
    %v411 = vmax.f32 %v405, %v409
    %v412 = vpack.c.bf16 %v411, %v410
    %414 = vset.pattern.permute.xlu0 0
    %415 = vperm.xlu0 %414, %v84
    %v416 = vpop.permute.xlu0 %415
    %vm418 = vcmask 130048
    %v420 = vsel %vm418, %v66, 0
    %422 = vmatprep.subr.bf16.mxu0 0
    %423 = vmatpush1.bf16.msra.mxu0 %v412
    %424 = vmatprep.subr.bf16.mxu0 0
    %425 = vmatpush1.bf16.msra.mxu0 0
    %426 = vmatprep.subr.bf16.mxu0 0
    %427 = vmatpush1.bf16.msra.mxu0 0
    %428 = vmatprep.subr.bf16.mxu0 0
    %429 = vmatpush1.bf16.msra.mxu0 0
    %430 = vmatprep.subr.bf16.mxu0 0
    %431 = vmatpush1.bf16.msra.mxu0 0
    %432 = vmatprep.subr.bf16.mxu0 0
    %433 = vmatpush1.bf16.msra.mxu0 0
    %434 = vmatprep.subr.bf16.mxu0 0
    %435 = vmatpush1.bf16.msra.mxu0 0
    %436 = vmatprep.subr.bf16.mxu0 0
    %437 = vmatpush1.bf16.msra.mxu0 0
    %438 = vmatprep.subr.bf16.mxu0 0
    %439 = vmatpush1.bf16.msra.mxu0 0
    %440 = vmatprep.subr.bf16.mxu0 0
    %441 = vmatpush1.bf16.msra.mxu0 0
    %442 = vmatprep.subr.bf16.mxu0 0
    %443 = vmatpush1.bf16.msra.mxu0 0
    %444 = vmatprep.subr.bf16.mxu0 0
    %445 = vmatpush1.bf16.msra.mxu0 0
    %446 = vmatprep.subr.bf16.mxu0 0
    %447 = vmatpush1.bf16.msra.mxu0 0
    %448 = vmatprep.subr.bf16.mxu0 0
    %449 = vmatpush1.bf16.msra.mxu0 0
    %450 = vmatprep.subr.bf16.mxu0 0
    %451 = vmatpush1.bf16.msra.mxu0 0
    %452 = vmatprep.subr.bf16.mxu0 0
    %453 = vmatpush1.bf16.msra.mxu0 0
    %454 = vmatprep.mubr.bf16.mxu0 0
    %455 = vmatmul.mubr.bf16.gmra.mrb[0].mxu0 %v420
    %v456 = vpop.f32.mrb[0].mxu0
    %v457 = vadd.f32 %v416, %v456
    %v458 = vpop.f32.mrb[0].mxu0
    %v459 = vpop.f32.mrb[0].mxu0
    %v460 = vpop.f32.mrb[0].mxu0
    %461 = vdwg.mxu0
    %v462 = vmul.f32 %v457, 0.01
    %v463 = vmax.f32 %v457, %v462
    %v464 = vpack.c.bf16 %v463, %v463
    %466 = vset.pattern.permute.xlu0 0
    %467 = vperm.xlu0 %466, %v85
    %v468 = vpop.permute.xlu0 %467
    %v471 = vsel %vm150, %v67, 0
    %v474 = vsel %vm163, %v464, 0
    %476 = vmatprep.subr.bf16.mxu0 0
    %477 = vmatpush1.bf16.msra.mxu0 %v474
    %478 = vmatprep.subr.bf16.mxu0 0
    %479 = vmatpush1.bf16.msra.mxu0 0
    %480 = vmatprep.subr.bf16.mxu0 0
    %481 = vmatpush1.bf16.msra.mxu0 0
    %482 = vmatprep.subr.bf16.mxu0 0
    %483 = vmatpush1.bf16.msra.mxu0 0
    %484 = vmatprep.subr.bf16.mxu0 0
    %485 = vmatpush1.bf16.msra.mxu0 0
    %486 = vmatprep.subr.bf16.mxu0 0
    %487 = vmatpush1.bf16.msra.mxu0 0
    %488 = vmatprep.subr.bf16.mxu0 0
    %489 = vmatpush1.bf16.msra.mxu0 0
    %490 = vmatprep.subr.bf16.mxu0 0
    %491 = vmatpush1.bf16.msra.mxu0 0
    %492 = vmatprep.subr.bf16.mxu0 0
    %493 = vmatpush1.bf16.msra.mxu0 0
    %494 = vmatprep.subr.bf16.mxu0 0
    %495 = vmatpush1.bf16.msra.mxu0 0
    %496 = vmatprep.subr.bf16.mxu0 0
    %497 = vmatpush1.bf16.msra.mxu0 0
    %498 = vmatprep.subr.bf16.mxu0 0
    %499 = vmatpush1.bf16.msra.mxu0 0
    %500 = vmatprep.subr.bf16.mxu0 0
    %501 = vmatpush1.bf16.msra.mxu0 0
    %502 = vmatprep.subr.bf16.mxu0 0
    %503 = vmatpush1.bf16.msra.mxu0 0
    %504 = vmatprep.subr.bf16.mxu0 0
    %505 = vmatpush1.bf16.msra.mxu0 0
    %506 = vmatprep.subr.bf16.mxu0 0
    %507 = vmatpush1.bf16.msra.mxu0 0
    %508 = vmatprep.mubr.bf16.mxu0 0
    %509 = vmatmul.mubr.bf16.gmra.mrb[0].mxu0 %v471
    %v510 = vpop.f32.mrb[0].mxu0
    %v511 = vadd.f32 %v468, %v510
    %v512 = vpop.f32.mrb[0].mxu0
    %v513 = vpop.f32.mrb[0].mxu0
    %v514 = vpop.f32.mrb[0].mxu0
    %515 = vdwg.mxu0
    %v516 = vmul.f32 %v511, 0.01
    %v517 = vmax.f32 %v511, %v516
    %v518 = vpack.c.bf16 %v517, %v517
    %520 = vset.pattern.permute.xlu0 0
    %521 = vperm.xlu0 %520, %v86
    %v522 = vpop.permute.xlu0 %521
    %v525 = vsel %vm150, %v68, 0
    %v528 = vsel %vm163, %v518, 0
    %530 = vmatprep.subr.bf16.mxu0 0
    %531 = vmatpush1.bf16.msra.mxu0 %v528
    %532 = vmatprep.subr.bf16.mxu0 0
    %533 = vmatpush1.bf16.msra.mxu0 0
    %534 = vmatprep.subr.bf16.mxu0 0
    %535 = vmatpush1.bf16.msra.mxu0 0
    %536 = vmatprep.subr.bf16.mxu0 0
    %537 = vmatpush1.bf16.msra.mxu0 0
    %538 = vmatprep.subr.bf16.mxu0 0
    %539 = vmatpush1.bf16.msra.mxu0 0
    %540 = vmatprep.subr.bf16.mxu0 0
    %541 = vmatpush1.bf16.msra.mxu0 0
    %542 = vmatprep.subr.bf16.mxu0 0
    %543 = vmatpush1.bf16.msra.mxu0 0
    %544 = vmatprep.subr.bf16.mxu0 0
    %545 = vmatpush1.bf16.msra.mxu0 0
    %546 = vmatprep.subr.bf16.mxu0 0
    %547 = vmatpush1.bf16.msra.mxu0 0
    %548 = vmatprep.subr.bf16.mxu0 0
    %549 = vmatpush1.bf16.msra.mxu0 0
    %550 = vmatprep.subr.bf16.mxu0 0
    %551 = vmatpush1.bf16.msra.mxu0 0
    %552 = vmatprep.subr.bf16.mxu0 0
    %553 = vmatpush1.bf16.msra.mxu0 0
    %554 = vmatprep.subr.bf16.mxu0 0
    %555 = vmatpush1.bf16.msra.mxu0 0
    %556 = vmatprep.subr.bf16.mxu0 0
    %557 = vmatpush1.bf16.msra.mxu0 0
    %558 = vmatprep.subr.bf16.mxu0 0
    %559 = vmatpush1.bf16.msra.mxu0 0
    %560 = vmatprep.subr.bf16.mxu0 0
    %561 = vmatpush1.bf16.msra.mxu0 0
    %562 = vmatprep.mubr.bf16.mxu0 0
    %563 = vmatmul.mubr.bf16.gmra.mrb[0].mxu0 %v525
    %v564 = vpop.f32.mrb[0].mxu0
    %v565 = vadd.f32 %v522, %v564
    %v566 = vpop.f32.mrb[0].mxu0
    %v567 = vpop.f32.mrb[0].mxu0
    %v568 = vpop.f32.mrb[0].mxu0
    %569 = vdwg.mxu0
    %v570 = vmul.f32 %v565, 0.01
    %v571 = vmax.f32 %v565, %v570
    %v572 = vpack.c.bf16 %v571, %v571
    %574 = vset.pattern.permute.xlu0 0
    %575 = vperm.xlu0 %574, %v87
    %v576 = vpop.permute.xlu0 %575
    %v579 = vsel %vm150, %v69, 0
    %v582 = vsel %vm163, %v572, 0
    %584 = vmatprep.subr.bf16.mxu0 0
    %585 = vmatpush1.bf16.msra.mxu0 %v582
    %586 = vmatprep.subr.bf16.mxu0 0
    %587 = vmatpush1.bf16.msra.mxu0 0
    %588 = vmatprep.subr.bf16.mxu0 0
    %589 = vmatpush1.bf16.msra.mxu0 0
    %590 = vmatprep.subr.bf16.mxu0 0
    %591 = vmatpush1.bf16.msra.mxu0 0
    %592 = vmatprep.subr.bf16.mxu0 0
    %593 = vmatpush1.bf16.msra.mxu0 0
    %594 = vmatprep.subr.bf16.mxu0 0
    %595 = vmatpush1.bf16.msra.mxu0 0
    %596 = vmatprep.subr.bf16.mxu0 0
    %597 = vmatpush1.bf16.msra.mxu0 0
    %598 = vmatprep.subr.bf16.mxu0 0
    %599 = vmatpush1.bf16.msra.mxu0 0
    %600 = vmatprep.subr.bf16.mxu0 0
    %601 = vmatpush1.bf16.msra.mxu0 0
    %602 = vmatprep.subr.bf16.mxu0 0
    %603 = vmatpush1.bf16.msra.mxu0 0
    %604 = vmatprep.subr.bf16.mxu0 0
    %605 = vmatpush1.bf16.msra.mxu0 0
    %606 = vmatprep.subr.bf16.mxu0 0
    %607 = vmatpush1.bf16.msra.mxu0 0
    %608 = vmatprep.subr.bf16.mxu0 0
    %609 = vmatpush1.bf16.msra.mxu0 0
    %610 = vmatprep.subr.bf16.mxu0 0
    %611 = vmatpush1.bf16.msra.mxu0 0
    %612 = vmatprep.subr.bf16.mxu0 0
    %613 = vmatpush1.bf16.msra.mxu0 0
    %614 = vmatprep.subr.bf16.mxu0 0
    %615 = vmatpush1.bf16.msra.mxu0 0
    %616 = vmatprep.mubr.bf16.mxu0 0
    %617 = vmatmul.mubr.bf16.gmra.mrb[0].mxu0 %v579
    %v618 = vpop.f32.mrb[0].mxu0
    %v619 = vadd.f32 %v576, %v618
    %v620 = vpop.f32.mrb[0].mxu0
    %v621 = vpop.f32.mrb[0].mxu0
    %v622 = vpop.f32.mrb[0].mxu0
    %623 = vdwg.mxu0
    %v624 = vmul.f32 %v619, 0.01
    %v625 = vmax.f32 %v619, %v624
    %626 = vst [vmem:[#allocation2] sm:$0x1] %v625
    // Predicated region
    $region62: #{tpu_custom_call.1} parent=1 // pred_check
      _
    $region63: #{tpu_custom_call.1} parent=1 // pred_check_branch
      %628 = sbr.rel (0) target = $region65
    $region64: #{tpu_custom_call.1} parent=1 // pred_region
      %s630 = ssub.s32 16, 16
      %631 = vsyncadd [#allocation3], %s630
      %s633 = sshll.u32 [#allocation2], 4
      %s634 = int_to_ptr.vmem [resolvable:$true] %s633
      %636 = dma.vmem_to_hbm [thread:$0]  %s634, 16, %s15, [#allocation3]
    $region65: #{tpu_custom_call.1} parent=1 // pred_fallthru
      _
    // Predicated region
    $region66: #{tpu_custom_call.1} parent=1 // pred_check
      _
    $region67: #{tpu_custom_call.1} parent=1 // pred_check_branch
      %638 = sbr.rel (0) target = $region69
    $region68: #{tpu_custom_call.1} parent=1 // pred_region
      %639 = dma.done [#allocation3], 16
    $region69: #{tpu_custom_call.1} parent=1 // pred_fallthru
      _
    %640 = vsyncpa [#allocation3], 1

</llo_original>
